<compile_context>
chip_gen: v5e
topology: v5e:2x2
jax: 0.10.0
libtpu: 0.0.40
codegen_flags: <defaults>
</compile_context>

<pallas_src>
import functools

import jax
import jax.numpy as jnp
import numpy as np
from jax.experimental import pallas as pl
from jax.experimental.pallas import tpu as pltpu


# ---------------------------------------------------------------------------
# Kernel 1: decoder_norm (LayerNorm eps=1e-6) + fused (decoder_pred o z2) matmul
# ---------------------------------------------------------------------------
def _ln_matmul_kernel(x_ref, g_ref, b_ref, w_ref, wb_ref, o_ref):
    # x: (bm, E)  g/b: (1, E)  w: (E, bd) bf16  wb: (1, bd) f32  o: (bm, bd) bf16
    x = x_ref[...].astype(jnp.float32)
    mu = jnp.mean(x, axis=-1, keepdims=True)
    var = jnp.mean(jnp.square(x - mu), axis=-1, keepdims=True)
    xn = (x - mu) * jax.lax.rsqrt(var + 1e-6)
    xn = xn * g_ref[...] + b_ref[...]                       # LayerNorm affine (f32)
    # bf16 x bf16 MXU matmul, f32 accumulation.
    y = jnp.dot(xn.astype(jnp.bfloat16), w_ref[...],
                preferred_element_type=jnp.float32)
    y = y + wb_ref[...]
    o_ref[...] = y.astype(o_ref.dtype)


def layernorm_matmul(x2d, gamma, beta, w_t_bf16, bias,
                     *, block_m=512, out_dtype=jnp.bfloat16):
    M, E = x2d.shape
    D = w_t_bf16.shape[1]

    block_m = min(block_m, M)
    # Keep the whole (E, D) weight resident unless it is large; otherwise tile D.
    if E * D * 2 * 2 <= 6 * 1024 * 1024:      # double-buffered bf16 weight
        block_d = D
    else:
        block_d = 512 if D >= 512 else D

    # Crude per-generation-safe VMEM budget (fits the 16 MiB default scoped
    # limit on v5e and leaves headroom on v7x's 64 MiB physical VMEM).
    def _vmem_bytes(bm, bd):
        return 2 * (bm * E * jnp.dtype(x2d.dtype).itemsize   # x blocks
                    + E * bd * 2                              # bf16 weight block
                    + bm * bd * 2                             # bf16 out block
                    + bd * 4 + 2 * E * 4)                     # bias, gamma, beta
    while block_m > 64 and _vmem_bytes(block_m, block_d) > 12 * 1024 * 1024:
        block_m //= 2

    grid = (pl.cdiv(M, block_m), pl.cdiv(D, block_d))
    return pl.pallas_call(
        _ln_matmul_kernel,
        out_shape=jax.ShapeDtypeStruct((M, D), out_dtype),
        grid_spec=pltpu.PrefetchScalarGridSpec(
            num_scalar_prefetch=0,
            grid=grid,
            in_specs=[
                pl.BlockSpec((block_m, E), lambda i, j: (i, 0)),
                pl.BlockSpec((1, E), lambda i, j: (0, 0)),
                pl.BlockSpec((1, E), lambda i, j: (0, 0)),
                pl.BlockSpec((E, block_d), lambda i, j: (0, j)),
                pl.BlockSpec((1, block_d), lambda i, j: (0, j)),
            ],
            out_specs=pl.BlockSpec((block_m, block_d), lambda i, j: (i, j)),
        ),
        compiler_params=pltpu.CompilerParams(
            dimension_semantics=("parallel", "arbitrary")),
    )(x2d, gamma.reshape(1, E), beta.reshape(1, E), w_t_bf16, bias.reshape(1, D))


# ---------------------------------------------------------------------------
# Kernel 2: lane-dense channel-planar blend, fully in NCHW layout
#   out = src * mask + mask_token * (1 - mask) + offset
# ---------------------------------------------------------------------------
def _blend_kernel(src_ref, off_ref, mask_ref, tok_ref, o_ref):
    m = mask_ref[...]                                       # (1, 1, bhw) f32
    blend = src_ref[...] * m + tok_ref[...] * (1.0 - m)     # (1, C, bhw)
    o_ref[...] = (blend + off_ref[...].astype(jnp.float32)).astype(o_ref.dtype)


def masked_blend_add(src3, off3, mask3, token, *, vmem_budget=8 * 1024 * 1024):
    N, C, HW = src3.shape
    # Per-column (per HW element) VMEM bytes, double-buffered:
    #   src f32 + out f32 + off bf16 per channel, + mask f32.
    per_col = 2 * (4 * C + 4 * C + 2 * C + 4)
    cap = max(128, (vmem_budget // per_col) // 128 * 128)
    bhw = HW if HW <= cap else cap                          # full dim or x128
    grid = (N, pl.cdiv(HW, bhw))
    tok3 = token.reshape(1, C, 1).astype(jnp.float32)
    return pl.pallas_call(
        _blend_kernel,
        out_shape=jax.ShapeDtypeStruct((N, C, HW), src3.dtype),
        grid_spec=pltpu.PrefetchScalarGridSpec(
            num_scalar_prefetch=0,
            grid=grid,
            in_specs=[
                pl.BlockSpec((1, C, bhw), lambda n, j: (n, 0, j)),
                pl.BlockSpec((1, C, bhw), lambda n, j: (n, 0, j)),
                pl.BlockSpec((1, 1, bhw), lambda n, j: (n, 0, j)),
                pl.BlockSpec((1, C, 1), lambda n, j: (0, 0, 0)),
            ],
            out_specs=pl.BlockSpec((1, C, bhw), lambda n, j: (n, 0, j)),
        ),
        compiler_params=pltpu.CompilerParams(
            dimension_semantics=("parallel", "arbitrary")),
    )(src3, off3, mask3, tok3)


# ---------------------------------------------------------------------------
# Glue
# ---------------------------------------------------------------------------
def resize_nearest(x, out_hw):
    """PyTorch F.interpolate(mode='nearest'): src_idx = floor(dst * in/out)."""
    N, Cm, Hm, Wm = x.shape
    Ho, Wo = out_hw
    idx_h = (jnp.arange(Ho) * Hm // Ho).astype(jnp.int32)
    idx_w = (jnp.arange(Wo) * Wm // Wo).astype(jnp.int32)
    return x[:, :, idx_h[:, None], idx_w[None, :]]


def init_projector_params(key, channel_dim, patch_size, embed_dim):
    k1, k2 = jax.random.split(key, 2)
    d_out = patch_size ** 2 * channel_dim
    return dict(
        # nn.Parameter(zeros(1,C,1,1)) then normal_(std=0.02) -> stored as (C,)
        mask_token=jax.random.normal(k1, (channel_dim,), jnp.float32) * 0.02,
        # LayerNorm: weight=1, bias=0
        ln_gamma=jnp.ones((embed_dim,), jnp.float32),
        ln_beta=jnp.zeros((embed_dim,), jnp.float32),
        # Linear: trunc_normal std=0.02 (torch weight is (d_out,E); stored transposed)
        pred_w_t=jax.random.truncated_normal(k2, -2.0, 2.0, (embed_dim, d_out),
                                             jnp.float32) * 0.02,
        pred_b=jnp.zeros((d_out,), jnp.float32),
        # z2: Conv2d 1x1; the module inits weight and bias to 0.
        z2_w_t=jnp.zeros((channel_dim, channel_dim), jnp.float32),  # (C_in, C_out)
        z2_b=jnp.zeros((channel_dim,), jnp.float32),
    )


def projector_forward(params, attn, src, mask, *, patch_size, channel_dim):
    N, L, E = attn.shape
    h = w = int(round(L ** 0.5))
    assert h * w == L
    p, C = patch_size, channel_dim
    Nc, Cs, H, W = src.shape
    assert Nc == N and Cs == C and H == h * p and W == w * p
    D = p * p * C

    # Fold the 1x1 conv (z2) into decoder_pred's weight/bias (exact linear
    # composition; tiny one-off einsum on the weights, not the activations).
    wz = params["z2_w_t"]                                            # (C_in, C_out)
    w_fused = jnp.einsum("eki,io->eko",
                         params["pred_w_t"].reshape(E, p * p, C), wz)
    w_fused = w_fused.reshape(E, D).astype(jnp.bfloat16)
    b_fused = (params["pred_b"].reshape(p * p, C) @ wz
               + params["z2_b"][None, :]).reshape(D).astype(jnp.float32)

    # Kernel 1: LayerNorm + fused (pred o z2) matmul  ->  bf16 offset tokens.
    y = layernorm_matmul(attn.reshape(N * L, E), params["ln_gamma"],
                         params["ln_beta"], w_fused, b_fused)

    # Unpatchify to NCHW offset (one XLA transpose of the bf16 intermediate).
    # TODO(synk): fold this permutation into kernel 2's BlockSpec / an in-kernel
    # relayout to remove the remaining read+write pass of the offset tensor.
    off = y.reshape(N, h, w, p, p, C)
    off = jnp.transpose(off, (0, 5, 1, 3, 2, 4)).reshape(N, C, H * W)

    # Nearest resize of the mask to src spatial dims (tiny; plain JAX).
    # TODO(synk): expand the low-res mask in-kernel to avoid materializing it.
    m = resize_nearest(mask.astype(jnp.float32), (H, W)).reshape(N, 1, H * W)

    # Kernel 2: src*m + mask_token*(1-m) + offset, read/written directly in NCHW.
    out = masked_blend_add(src.reshape(N, C, H * W), off, m, params["mask_token"])
    return out.reshape(N, C, H, W)


# ---------------------------------------------------------------------------
# Plain-JAX reference (mirrors the PyTorch forward, f32) for correctness check
# ---------------------------------------------------------------------------
def projector_reference(params, attn, src, mask, *, patch_size, channel_dim):
    N, L, E = attn.shape
    h = w = int(round(L ** 0.5))
    p, C = patch_size, channel_dim
    mu = jnp.mean(attn, -1, keepdims=True)
    var = jnp.mean((attn - mu) ** 2, -1, keepdims=True)
    xn = (attn - mu) / jnp.sqrt(var + 1e-6) * params["ln_gamma"] + params["ln_beta"]
    t = xn @ params["pred_w_t"] + params["pred_b"]
    t = t.reshape(N, h, w, p, p, C)
    feats = jnp.einsum("nhwpqc->nchpwq", t).reshape(N, C, h * p, w * p)
    offs = jnp.einsum("io,nihw->nohw", params["z2_w_t"], feats) \
        + params["z2_b"][None, :, None, None]
    H, W = src.shape[2:]
    m = resize_nearest(mask.astype(jnp.float32), (H, W))
    x_ini = src * m + params["mask_token"][None, :, None, None] * (1.0 - m)
    return x_ini + offs


if __name__ == "__main__":
    # Small shapes: channel_dim=4, patch_size=4, embed_dim=32, batch=2,
    # L=16 tokens (h=w=4) -> src spatial 16x16, mask at 8x8.
    N, C, P, E = 2, 4, 4, 32
    h = w = 4
    L = h * w
    H = W = h * P

    key = jax.random.PRNGKey(0)
    kp, ka, ks, km, kz1, kz2 = jax.random.split(key, 6)
    params = init_projector_params(kp, C, P, E)
    # The module inits z2 to zero; use non-zero values here so the folded conv
    # path is actually exercised by the numerical check (forward must hold for
    # arbitrary trained parameters).
    params["z2_w_t"] = jax.random.normal(kz1, (C, C), jnp.float32) * 0.2
    params["z2_b"] = jax.random.normal(kz2, (C,), jnp.float32) * 0.1

    attn = jax.random.normal(ka, (N, L, E), jnp.float32)
    src = jax.random.normal(ks, (N, C, H, W), jnp.float32)
    mask = jax.random.bernoulli(km, 0.5, (N, 1, 8, 8)).astype(jnp.float32)

    fwd = jax.jit(functools.partial(projector_forward, patch_size=P, channel_dim=C))
    out = jax.block_until_ready(fwd(params, attn, src, mask))

    ref = projector_reference(params, attn, src, mask, patch_size=P, channel_dim=C)
    # Tolerance covers the bf16 MXU operands / bf16 offset intermediate.
    np.testing.assert_allclose(np.asarray(out), np.asarray(ref),
                               rtol=2e-2, atol=2e-2)
    assert out.shape == (N, C, H, W)
    print("KERNEL_OK")
</pallas_src>

<mosaic_0001>
module attributes {stable_mosaic.version = 11 : i64} {
  func.func @_ln_matmul_kernel(%arg0: i32, %arg1: i32, %arg2: memref<32x32xf32, #tpu.memory_space<vmem>>, %arg3: memref<1x32xf32, #tpu.memory_space<vmem>>, %arg4: memref<1x32xf32, #tpu.memory_space<vmem>>, %arg5: memref<32x64xbf16, #tpu.memory_space<vmem>>, %arg6: memref<1x64xf32, #tpu.memory_space<vmem>>, %arg7: memref<32x64xbf16, #tpu.memory_space<vmem>>) attributes {dimension_semantics = [#tpu.dimension_semantics<parallel>, #tpu.dimension_semantics<arbitrary>], iteration_bounds = array<i64: 1, 1>, scalar_prefetch = 0 : i64, scratch_operands = 0 : i64, tpu.core_type = #tpu.core_type<tc>, window_params = [{transform_indices = @transform_0, window_bounds = array<i64: 32, 32>}, {pipeline_mode = #tpu.pipeline_mode<synchronous>, transform_indices = @transform_1, window_bounds = array<i64: 1, 32>}, {pipeline_mode = #tpu.pipeline_mode<synchronous>, transform_indices = @transform_2, window_bounds = array<i64: 1, 32>}, {transform_indices = @transform_3, window_bounds = array<i64: 32, 64>}, {transform_indices = @transform_4, window_bounds = array<i64: 1, 64>}, {transform_indices = @transform_5, window_bounds = array<i64: 32, 64>}]} {
    %c0 = arith.constant 0 : index
    %c0_0 = arith.constant 0 : index
    %0 = vector.load %arg2[%c0, %c0_0] : memref<32x32xf32, #tpu.memory_space<vmem>>, vector<32x32xf32>
    %cst = arith.constant dense<0.000000e+00> : vector<32xf32>
    %1 = vector.multi_reduction <add>, %0, %cst [1] : vector<32x32xf32> to vector<32xf32>
    %2 = vector.shape_cast %1 : vector<32xf32> to vector<32x1xf32>
    %cst_1 = arith.constant 3.200000e+01 : f32
    %3 = vector.broadcast %cst_1 : f32 to vector<32x1xf32>
    %4 = arith.divf %2, %3 : vector<32x1xf32>
    %5 = vector.broadcast %4 : vector<32x1xf32> to vector<32x32xf32>
    %6 = arith.subf %0, %5 : vector<32x32xf32>
    %7 = arith.mulf %6, %6 : vector<32x32xf32>
    %cst_2 = arith.constant dense<0.000000e+00> : vector<32xf32>
    %8 = vector.multi_reduction <add>, %7, %cst_2 [1] : vector<32x32xf32> to vector<32xf32>
    %9 = vector.shape_cast %8 : vector<32xf32> to vector<32x1xf32>
    %cst_3 = arith.constant 3.200000e+01 : f32
    %10 = vector.broadcast %cst_3 : f32 to vector<32x1xf32>
    %11 = arith.divf %9, %10 : vector<32x1xf32>
    %12 = vector.broadcast %4 : vector<32x1xf32> to vector<32x32xf32>
    %13 = arith.subf %0, %12 : vector<32x32xf32>
    %cst_4 = arith.constant 9.99999997E-7 : f32
    %14 = vector.broadcast %cst_4 : f32 to vector<32x1xf32>
    %15 = arith.addf %11, %14 : vector<32x1xf32>
    %16 = math.rsqrt %15 : vector<32x1xf32>
    %17 = vector.broadcast %16 : vector<32x1xf32> to vector<32x32xf32>
    %18 = arith.mulf %13, %17 : vector<32x32xf32>
    %c0_5 = arith.constant 0 : index
    %c0_6 = arith.constant 0 : index
    %19 = vector.load %arg3[%c0_5, %c0_6] : memref<1x32xf32, #tpu.memory_space<vmem>>, vector<1x32xf32>
    %20 = vector.broadcast %19 : vector<1x32xf32> to vector<32x32xf32>
    %21 = arith.mulf %18, %20 : vector<32x32xf32>
    %c0_7 = arith.constant 0 : index
    %c0_8 = arith.constant 0 : index
    %22 = vector.load %arg4[%c0_7, %c0_8] : memref<1x32xf32, #tpu.memory_space<vmem>>, vector<1x32xf32>
    %23 = vector.broadcast %22 : vector<1x32xf32> to vector<32x32xf32>
    %24 = arith.addf %21, %23 : vector<32x32xf32>
    %25 = arith.truncf %24 : vector<32x32xf32> to vector<32x32xbf16>
    %c0_9 = arith.constant 0 : index
    %c0_10 = arith.constant 0 : index
    %26 = vector.load %arg5[%c0_9, %c0_10] : memref<32x64xbf16, #tpu.memory_space<vmem>>, vector<32x64xbf16>
    %cst_11 = arith.constant dense<0.000000e+00> : vector<32x64xf32>
    %27 = tpu.matmul %25, %26, %cst_11 {dimension_numbers = #tpu.dot_dimension_numbers<[1], [0], [0], [1], [0, 0, 1, 1], [], []>} : vector<32x32xbf16>, vector<32x64xbf16>, vector<32x64xf32> -> vector<32x64xf32>
    %c0_12 = arith.constant 0 : index
    %c0_13 = arith.constant 0 : index
    %28 = vector.load %arg6[%c0_12, %c0_13] : memref<1x64xf32, #tpu.memory_space<vmem>>, vector<1x64xf32>
    %29 = vector.broadcast %28 : vector<1x64xf32> to vector<32x64xf32>
    %30 = arith.addf %27, %29 : vector<32x64xf32>
    %31 = arith.truncf %30 : vector<32x64xf32> to vector<32x64xbf16>
    %c0_14 = arith.constant 0 : index
    %c0_15 = arith.constant 0 : index
    %32 = vector.load %arg7[%c0_14, %c0_15] : memref<32x64xbf16, #tpu.memory_space<vmem>>, vector<32x64xbf16>
    tpu.vector_store %arg7[%c0_14, %c0_15], %31 {strides = array<i32>} : memref<32x64xbf16, #tpu.memory_space<vmem>>, vector<32x64xbf16>,
    return
  }
  func.func @transform_0(%arg0: i32, %arg1: i32) -> (i32, i32) {
    %c0_i32 = arith.constant 0 : i32
    %c0_i32_0 = arith.constant 0 : i32
    return %arg0, %c0_i32 : i32, i32
  }
  func.func @transform_1(%arg0: i32, %arg1: i32) -> (i32, i32) {
    %c0_i32 = arith.constant 0 : i32
    %c0_i32_0 = arith.constant 0 : i32
    %c0_i32_1 = arith.constant 0 : i32
    return %c0_i32, %c0_i32_0 : i32, i32
  }
  func.func @transform_2(%arg0: i32, %arg1: i32) -> (i32, i32) {
    %c0_i32 = arith.constant 0 : i32
    %c0_i32_0 = arith.constant 0 : i32
    %c0_i32_1 = arith.constant 0 : i32
    return %c0_i32, %c0_i32_0 : i32, i32
  }
  func.func @transform_3(%arg0: i32, %arg1: i32) -> (i32, i32) {
    %c0_i32 = arith.constant 0 : i32
    %c0_i32_0 = arith.constant 0 : i32
    return %c0_i32, %arg1 : i32, i32
  }
  func.func @transform_4(%arg0: i32, %arg1: i32) -> (i32, i32) {
    %c0_i32 = arith.constant 0 : i32
    %c0_i32_0 = arith.constant 0 : i32
    return %c0_i32, %arg1 : i32, i32
  }
  func.func @transform_5(%arg0: i32, %arg1: i32) -> (i32, i32) {
    %c0_i32 = arith.constant 0 : i32
    return %arg0, %arg1 : i32, i32
  }
}

module attributes {stable_mosaic.version = 11 : i64} {
  func.func @_blend_kernel(%arg0: i32, %arg1: i32, %arg2: memref<1x4x256xf32, #tpu.memory_space<vmem>>, %arg3: memref<1x4x256xbf16, #tpu.memory_space<vmem>>, %arg4: memref<1x1x256xf32, #tpu.memory_space<vmem>>, %arg5: memref<1x4x1xf32, #tpu.memory_space<vmem>>, %arg6: memref<1x4x256xf32, #tpu.memory_space<vmem>>) attributes {dimension_semantics = [#tpu.dimension_semantics<parallel>, #tpu.dimension_semantics<arbitrary>], iteration_bounds = array<i64: 2, 1>, scalar_prefetch = 0 : i64, scratch_operands = 0 : i64, tpu.core_type = #tpu.core_type<tc>, window_params = [{transform_indices = @transform_0, window_bounds = array<i64: 1, 4, 256>}, {transform_indices = @transform_1, window_bounds = array<i64: 1, 4, 256>}, {transform_indices = @transform_2, window_bounds = array<i64: 1, 1, 256>}, {pipeline_mode = #tpu.pipeline_mode<synchronous>, transform_indices = @transform_3, window_bounds = array<i64: 1, 4, 1>}, {transform_indices = @transform_4, window_bounds = array<i64: 1, 4, 256>}]} {
    %c0 = arith.constant 0 : index
    %c0_0 = arith.constant 0 : index
    %c0_1 = arith.constant 0 : index
    %0 = vector.load %arg4[%c0, %c0_0, %c0_1] : memref<1x1x256xf32, #tpu.memory_space<vmem>>, vector<1x1x256xf32>
    %c0_2 = arith.constant 0 : index
    %c0_3 = arith.constant 0 : index
    %c0_4 = arith.constant 0 : index
    %1 = vector.load %arg2[%c0_2, %c0_3, %c0_4] : memref<1x4x256xf32, #tpu.memory_space<vmem>>, vector<1x4x256xf32>
    %2 = vector.broadcast %0 : vector<1x1x256xf32> to vector<1x4x256xf32>
    %3 = arith.mulf %1, %2 : vector<1x4x256xf32>
    %c0_5 = arith.constant 0 : index
    %c0_6 = arith.constant 0 : index
    %c0_7 = arith.constant 0 : index
    %4 = vector.load %arg5[%c0_5, %c0_6, %c0_7] : memref<1x4x1xf32, #tpu.memory_space<vmem>>, vector<1x4x1xf32>
    %cst = arith.constant 1.000000e+00 : f32
    %5 = vector.broadcast %cst : f32 to vector<1x1x256xf32>
    %6 = arith.subf %5, %0 : vector<1x1x256xf32>
    %7 = vector.broadcast %4 : vector<1x4x1xf32> to vector<1x4x256xf32>
    %8 = vector.broadcast %6 : vector<1x1x256xf32> to vector<1x4x256xf32>
    %9 = arith.mulf %7, %8 : vector<1x4x256xf32>
    %10 = arith.addf %3, %9 : vector<1x4x256xf32>
    %c0_8 = arith.constant 0 : index
    %c0_9 = arith.constant 0 : index
    %c0_10 = arith.constant 0 : index
    %11 = vector.load %arg3[%c0_8, %c0_9, %c0_10] : memref<1x4x256xbf16, #tpu.memory_space<vmem>>, vector<1x4x256xbf16>
    %12 = arith.extf %11 : vector<1x4x256xbf16> to vector<1x4x256xf32>
    %13 = arith.addf %10, %12 : vector<1x4x256xf32>
    %c0_11 = arith.constant 0 : index
    %c0_12 = arith.constant 0 : index
    %c0_13 = arith.constant 0 : index
    %14 = vector.load %arg6[%c0_11, %c0_12, %c0_13] : memref<1x4x256xf32, #tpu.memory_space<vmem>>, vector<1x4x256xf32>
    tpu.vector_store %arg6[%c0_11, %c0_12, %c0_13], %13 {strides = array<i32>} : memref<1x4x256xf32, #tpu.memory_space<vmem>>, vector<1x4x256xf32>,
    return
  }
  func.func @transform_0(%arg0: i32, %arg1: i32) -> (i32, i32, i32) {
    %c0_i32 = arith.constant 0 : i32
    %c0_i32_0 = arith.constant 0 : i32
    return %arg0, %c0_i32, %arg1 : i32, i32, i32
  }
  func.func @transform_1(%arg0: i32, %arg1: i32) -> (i32, i32, i32) {
    %c0_i32 = arith.constant 0 : i32
    %c0_i32_0 = arith.constant 0 : i32
    return %arg0, %c0_i32, %arg1 : i32, i32, i32
  }
  func.func @transform_2(%arg0: i32, %arg1: i32) -> (i32, i32, i32) {
    %c0_i32 = arith.constant 0 : i32
    %c0_i32_0 = arith.constant 0 : i32
    return %arg0, %c0_i32, %arg1 : i32, i32, i32
  }
  func.func @transform_3(%arg0: i32, %arg1: i32) -> (i32, i32, i32) {
    %c0_i32 = arith.constant 0 : i32
    %c0_i32_0 = arith.constant 0 : i32
    %c0_i32_1 = arith.constant 0 : i32
    %c0_i32_2 = arith.constant 0 : i32
    return %c0_i32, %c0_i32_0, %c0_i32_1 : i32, i32, i32
  }
  func.func @transform_4(%arg0: i32, %arg1: i32) -> (i32, i32, i32) {
    %c0_i32 = arith.constant 0 : i32
    %c0_i32_0 = arith.constant 0 : i32
    return %arg0, %c0_i32, %arg1 : i32, i32, i32
  }
}

</mosaic_0001>

<llo_original>
// kernel: projector_forward.2
$region0: #{projector_forward.2}
  #allocation0 [shape = 'u32[]', space=smem, size = 0x4, offset = 0x4, fixed_abs, tag = 'smem constant byte address 0x4 - core index']
  #allocation1 [shape = 'u32[72,128]{1,0:T(1,128)}', space=vmem, size = 0x9000, scoped, tag = 'internal scratch']
  %s0 = inlined_call_operand.vmem [shape: f32[32,32], index: 0, kind: input, shape index: {}]
  %s1 = inlined_call_operand.vmem [shape: f32[1,32], index: 1, kind: input, shape index: {}]
  %s2 = inlined_call_operand.vmem [shape: f32[1,32], index: 2, kind: input, shape index: {}]
  %s3 = inlined_call_operand.vmem [shape: bf16[32,64], index: 3, kind: input, shape index: {}]
  %s4 = inlined_call_operand.vmem [shape: f32[1,64], index: 4, kind: input, shape index: {}]
  %s5 = inlined_call_operand.vmem [shape: bf16[32,64], index: 5, kind: output, shape index: {}]
  %s6 = sld [smem:[#allocation0]]
  $region30: #{projector_forward.2} parent=0
    _
  %s8 = ssub.s32 1, %s6
  %s9 = scalar_select 0, %s8, %s6
  // Predicated region
  $region2: #{projector_forward.2} parent=0 // pred_check
    _
  $region3: #{projector_forward.2} parent=0 // pred_check_branch
    %11 = sbr.rel (0) target = $region5
  $region4: #{projector_forward.2} parent=0 // pred_region
    _
  $region5: #{projector_forward.2} parent=0 // pred_fallthru
    _
  // Predicated region
  $region6: #{projector_forward.2} parent=0 // pred_check
    _
  $region7: #{projector_forward.2} parent=0 // pred_check_branch
    %13 = sbr.rel (0) target = $region9
  $region8: #{projector_forward.2} parent=0 // pred_region
    _
  $region9: #{projector_forward.2} parent=0 // pred_fallthru
    _
  // Predicated region
  $region10: #{projector_forward.2} parent=0 // pred_check
    _
  $region11: #{projector_forward.2} parent=0 // pred_check_branch
    %15 = sbr.rel (0) target = $region13
  $region12: #{projector_forward.2} parent=0 // pred_region
    _
  $region13: #{projector_forward.2} parent=0 // pred_fallthru
    _
  // Predicated region
  $region14: #{projector_forward.2} parent=0 // pred_check
    _
  $region15: #{projector_forward.2} parent=0 // pred_check_branch
    %17 = sbr.rel (0) target = $region17
  $region16: #{projector_forward.2} parent=0 // pred_region
    _
  $region17: #{projector_forward.2} parent=0 // pred_fallthru
    _
  // Predicated region
  $region18: #{projector_forward.2} parent=0 // pred_check
    _
  $region19: #{projector_forward.2} parent=0 // pred_check_branch
    %19 = sbr.rel (0) target = $region21
  $region20: #{projector_forward.2} parent=0 // pred_region
    _
  $region21: #{projector_forward.2} parent=0 // pred_fallthru
    _
  %v21 = vld [vmem:[%s0] sm:$0xff]
  %v22 = vld [vmem:[%s0 + $0x8] sm:$0xff]
  %v23 = vld [vmem:[%s0 + $0x10] sm:$0xff]
  %v24 = vld [vmem:[%s0 + $0x18] sm:$0xff]
  %vm25 = vcmask 261120
  %v26 = vsel %vm25, %v21, 0.0
  %27 = vadd.xlane.f32.xlu0 %v26
  %v28 = vpop.xlane.xlu0 %27
  %v29 = vsel %vm25, %v22, 0.0
  %30 = vadd.xlane.f32.xlu0 %v29
  %v31 = vpop.xlane.xlu0 %30
  %v32 = vsel %vm25, %v23, 0.0
  %33 = vadd.xlane.f32.xlu0 %v32
  %v34 = vpop.xlane.xlu0 %33
  %v35 = vsel %vm25, %v24, 0.0
  %36 = vadd.xlane.f32.xlu0 %v35
  %v37 = vpop.xlane.xlu0 %36
  %v38 = vrcp.pop 32.0
  %v39 = vmul.f32 32.0, %v38
  %v40 = vsub.f32 1.0, %v39
  %v41 = vmul.f32 %v38, %v40
  %v42 = vadd.f32 %v38, %v41
  %vm43 = vweird.f32 %v38
  %v44 = vsel %vm43, %v38, %v42
  %v45 = vmul.f32 %v28, %v44
  %v46 = vmul.f32 %v31, %v44
  %v47 = vmul.f32 %v34, %v44
  %v48 = vmul.f32 %v37, %v44
  %v49 = vsub.f32 %v21, %v45
  %v50 = vsub.f32 %v22, %v46
  %v51 = vsub.f32 %v23, %v47
  %v52 = vsub.f32 %v24, %v48
  %v53 = vmul.f32 %v49, %v49
  %v54 = vmul.f32 %v50, %v50
  %v55 = vmul.f32 %v51, %v51
  %v56 = vmul.f32 %v52, %v52
  %v57 = vsel %vm25, %v53, 0.0
  %58 = vadd.xlane.f32.xlu0 %v57
  %v59 = vpop.xlane.xlu0 %58
  %v60 = vsel %vm25, %v54, 0.0
  %61 = vadd.xlane.f32.xlu0 %v60
  %v62 = vpop.xlane.xlu0 %61
  %v63 = vsel %vm25, %v55, 0.0
  %64 = vadd.xlane.f32.xlu0 %v63
  %v65 = vpop.xlane.xlu0 %64
  %v66 = vsel %vm25, %v56, 0.0
  %67 = vadd.xlane.f32.xlu0 %v66
  %v68 = vpop.xlane.xlu0 %67
  %v69 = vmul.f32 %v59, %v44
  %v70 = vmul.f32 %v62, %v44
  %v71 = vmul.f32 %v65, %v44
  %v72 = vmul.f32 %v68, %v44
  %v73 = vadd.f32 %v69, 1e-06
  %v74 = vadd.f32 %v70, 1e-06
  %v75 = vadd.f32 %v71, 1e-06
  %v76 = vadd.f32 %v72, 1e-06
  %v77 = vrsqrt.pop %v73
  %v78 = vmul.f32 %v77, %v73
  %v79 = vmul.f32 %v78, %v77
  %v80 = vmul.f32 0.5, %v79
  %v81 = vsub.f32 1.5, %v80
  %v82 = vmul.f32 %v77, %v81
  %vm83 = vweird.f32 %v73
  %vm84 = vweird.f32 %v77
  %vm85 = vmor %vm83, %vm84
  %v86 = vsel %vm85, %v77, %v82
  %v87 = vrsqrt.pop %v74
  %v88 = vmul.f32 %v87, %v74
  %v89 = vmul.f32 %v88, %v87
  %v90 = vmul.f32 0.5, %v89
  %v91 = vsub.f32 1.5, %v90
  %v92 = vmul.f32 %v87, %v91
  %vm93 = vweird.f32 %v74
  %vm94 = vweird.f32 %v87
  %vm95 = vmor %vm93, %vm94
  %v96 = vsel %vm95, %v87, %v92
  %v97 = vrsqrt.pop %v75
  %v98 = vmul.f32 %v97, %v75
  %v99 = vmul.f32 %v98, %v97
  %v100 = vmul.f32 0.5, %v99
  %v101 = vsub.f32 1.5, %v100
  %v102 = vmul.f32 %v97, %v101
  %vm103 = vweird.f32 %v75
  %vm104 = vweird.f32 %v97
  %vm105 = vmor %vm103, %vm104
  %v106 = vsel %vm105, %v97, %v102
  %v107 = vrsqrt.pop %v76
  %v108 = vmul.f32 %v107, %v76
  %v109 = vmul.f32 %v108, %v107
  %v110 = vmul.f32 0.5, %v109
  %v111 = vsub.f32 1.5, %v110
  %v112 = vmul.f32 %v107, %v111
  %vm113 = vweird.f32 %v76
  %vm114 = vweird.f32 %v107
  %vm115 = vmor %vm113, %vm114
  %v116 = vsel %vm115, %v107, %v112
  %v117 = vmul.f32 %v49, %v86
  %v118 = vmul.f32 %v50, %v96
  %v119 = vmul.f32 %v51, %v106
  %v120 = vmul.f32 %v52, %v116
  %v121 = vld [vmem:[%s1] sm:$0x1]
  %v123 = vperm.slane %v121, 0
  %v125 = vmul.f32 %v117, %v123
  %v126 = vmul.f32 %v118, %v123
  %v127 = vmul.f32 %v119, %v123
  %v128 = vmul.f32 %v120, %v123
  %v129 = vld [vmem:[%s2] sm:$0x1]
  %v131 = vperm.slane %v129, 0
  %v133 = vadd.f32 %v125, %v131
  %v134 = vadd.f32 %v126, %v131
  %v135 = vadd.f32 %v127, %v131
  %v136 = vadd.f32 %v128, %v131
  %v137 = vpack.c.bf16 %v134, %v133
  %v138 = vpack.c.bf16 %v136, %v135
  %v139 = vld [vmem:[%s3] sm:$0xf]
  %v140 = vld [vmem:[%s3 + $0x4] sm:$0xf]
  %v141 = vld [vmem:[%s3 + $0x8] sm:$0xf]
  %v142 = vld [vmem:[%s3 + $0xc] sm:$0xf]
  %v143 = vld [vmem:[%s4] sm:$0x1]
  %v145 = vperm.slane %v143, 0
  %v151 = vunpack.c.l.b16 %v139
  %v152 = vunpack.c.l.b16 %v140
  %v153 = vunpack.c.l.b16 %v141
  %v154 = vunpack.c.l.b16 %v142
  %v155 = vpack.c.b16 %v152, %v151
  %v156 = vpack.c.b16 %v154, %v153
  %v160 = vsel %vm25, %v137, 0
  %v163 = vsel %vm25, %v138, 0
  %165 = vmatpush.bf16.msra.mxu0 0
  %166 = vmatpush.bf16.msra.mxu0 0
  %167 = vmatpush.bf16.msra.mxu0 0
  %168 = vmatpush.bf16.msra.mxu0 0
  %169 = vmatpush.bf16.msra.mxu0 0
  %170 = vmatpush.bf16.msra.mxu0 0
  %171 = vmatpush.bf16.msra.mxu0 %v156
  %172 = vmatpush.bf16.msra.mxu0 %v155
  %173 = vmatmul.bf16.gmra.mxu0 %v160
  %v174 = vpop.f32.mrf.mxu0
  %v175 = vadd.f32 %v145, %v174
  %v176 = vpop.f32.mrf.mxu0
  %v177 = vadd.f32 %v145, %v176
  %178 = vmatmul.bf16.gmra.mxu0 %v163
  %v179 = vpop.f32.mrf.mxu0
  %v180 = vadd.f32 %v145, %v179
  %v181 = vpop.f32.mrf.mxu0
  %v182 = vadd.f32 %v145, %v181
  %183 = vdwg.mxu0
  %v184 = vpack.c.bf16 %v175, %v175
  %v185 = vpack.c.bf16 %v177, %v177
  %v186 = vpack.c.bf16 %v180, %v180
  %v187 = vpack.c.bf16 %v182, %v182
  %vm188 = vcmask 519168
  %189 = vst.msk [vmem:[%s5] sm:$0xf] %vm188, %v184
  %190 = vst.msk [vmem:[%s5 + $0x4] sm:$0xf] %vm188, %v185
  %191 = vst.msk [vmem:[%s5 + $0x8] sm:$0xf] %vm188, %v186
  %192 = vst.msk [vmem:[%s5 + $0xc] sm:$0xf] %vm188, %v187
  // Predicated region
  $region22: #{projector_forward.2} parent=0 // pred_check
    _
  $region23: #{projector_forward.2} parent=0 // pred_check_branch
    %194 = sbr.rel (0) target = $region25
  $region24: #{projector_forward.2} parent=0 // pred_region
    _
  $region25: #{projector_forward.2} parent=0 // pred_fallthru
    _
  // Predicated region
  $region26: #{projector_forward.2} parent=0 // pred_check
    _
  $region27: #{projector_forward.2} parent=0 // pred_check_branch
    %196 = sbr.rel (0) target = $region29
  $region28: #{projector_forward.2} parent=0 // pred_region
    _
  $region29: #{projector_forward.2} parent=0 // pred_fallthru
    _

// kernel: projector_forward.3
$region0: #{projector_forward.3}
  #allocation0 [shape = 'u32[]', space=smem, size = 0x4, offset = 0x4, fixed_abs, tag = 'smem constant byte address 0x4 - core index']
  #allocation1 [shape = 'u32[72,128]{1,0:T(1,128)}', space=vmem, size = 0x9000, scoped, tag = 'internal scratch']
  %s0 = inlined_call_operand.vmem [shape: f32[2,4,256], index: 0, kind: input, shape index: {}]
  %s1 = inlined_call_operand.vmem [shape: bf16[2,4,256], index: 1, kind: input, shape index: {}]
  %s2 = inlined_call_operand.vmem [shape: f32[2,1,256], index: 2, kind: input, shape index: {}]
  %s3 = inlined_call_operand.vmem [shape: f32[1,4,1], index: 3, kind: input, shape index: {}]
  %s4 = inlined_call_operand.vmem [shape: f32[2,4,256], index: 4, kind: output, shape index: {}]
  %s5 = sld [smem:[#allocation0]]
  $region49: #{projector_forward.3} parent=0
    _
  %s7 = ssub.s32 1, %s5
  %s8 = scalar_select 0, %s7, %s5
  loop: start=0, step=1, limit=4
  $region2: #{projector_forward.3} parent=0 // loop_pre_header
    _
  $region3: #{projector_forward.3} parent=0 // loop_header
    %s10 = sphi 0, %s14
    %p11 = scmp.ge.s32.totalorder %s10, 4
    %s17 = sphi 0, %s29
    %s18 = sphi 0, %s25
    %s19 = sphi 0, %s17
    %s20 = sphi 0, %s18
    %s21 = sphi 0, %s19
    %s22 = sphi 0, %s20
    %s34 = sphi 0, %s36
    %s37 = sphi 0, %s34
    %s38 = sphi 0, %s37
    %s54 = sphi 0, %s38
    %s62 = sphi 0, %s64
    %s65 = sphi 0, %s62
    %s66 = sphi 0, %s65
    %s82 = sphi 0, %s66
    %s90 = sphi 0, %s92
    %s93 = sphi 0, %s90
    %s94 = sphi 0, %s93
    %s110 = sphi 0, %s94
    %s114 = sphi 0, %s114
    %s116 = sphi 0, %s114
    %s117 = sphi 0, %s116
    %s131 = sphi 0, %s117
    %s139 = sphi 0, %s141
    %s142 = sphi 0, %s139
    %s143 = sphi 0, %s142
    %s159 = sphi 0, %s143
  $region4: #{projector_forward.3} parent=0 // loop_header_branch
    %13 = sbr.rel (%p11) target = $region8
  $region5: #{projector_forward.3} parent=0 // loop_body
    %s15 = ssub.s32 %s10, 1
    %s16 = ssub.s32 %s10, 2
    %s23 = sadd.s32 1, %s18
    %p24 = scmp.ge.s32.totalorder %s23, 1
    %s25 = scalar_select %p24, 0, %s23
    %s26 = sadd.s32 1, %s17
    %s27 = scalar_select %p24, %s26, %s17
    %p28 = scmp.ge.s32.totalorder %s27, 2
    %s29 = scalar_select %p28, 0, %s27
    %s30 = ssub.s32 %s17, %s29
    %s31 = ssub.s32 %s18, %s25
    %s32 = sor.u32 %s30, %s31
    %p33 = scmp.eq.s32.totalorder %s32, 0
    %s35 = sadd.s32 %s34, 1
    %s36 = scalar_select %p33, %s34, %s35
    %p39 = pneg %p33
    %p40 = scmp.eq.s32.totalorder %s10, 1
    %p41 = por %p39, %p40
    %p42 = scmp.ne.s32.totalorder %s34, %s37
    %p43 = scmp.eq.s32.totalorder %s10, 0
    %p44 = por %p42, %p43
    %p45 = scmp.ne.s32.totalorder %s34, %s37
    %p46 = scmp.eq.s32.totalorder %s15, 1
    %p47 = por %p45, %p46
    %p48 = scmp.ne.s32.totalorder %s37, %s38
    %p49 = scmp.eq.s32.totalorder %s15, 0
    %p50 = por %p48, %p49
    %p51 = scmp.ne.s32.totalorder %s37, %s38
    %p52 = scmp.eq.s32.totalorder %s16, 1
    %p53 = por %p51, %p52
    %p55 = scmp.ne.s32.totalorder %s38, %s54
    %p56 = scmp.eq.s32.totalorder %s16, 0
    %p57 = por %p55, %p56
    %s58 = ssub.s32 %s17, %s29
    %s59 = ssub.s32 %s18, %s25
    %s60 = sor.u32 %s58, %s59
    %p61 = scmp.eq.s32.totalorder %s60, 0
    %s63 = sadd.s32 %s62, 1
    %s64 = scalar_select %p61, %s62, %s63
    %p67 = pneg %p61
    %p68 = scmp.eq.s32.totalorder %s10, 1
    %p69 = por %p67, %p68
    %p70 = scmp.ne.s32.totalorder %s62, %s65
    %p71 = scmp.eq.s32.totalorder %s10, 0
    %p72 = por %p70, %p71
    %p73 = scmp.ne.s32.totalorder %s62, %s65
    %p74 = scmp.eq.s32.totalorder %s15, 1
    %p75 = por %p73, %p74
    %p76 = scmp.ne.s32.totalorder %s65, %s66
    %p77 = scmp.eq.s32.totalorder %s15, 0
    %p78 = por %p76, %p77
    %p79 = scmp.ne.s32.totalorder %s65, %s66
    %p80 = scmp.eq.s32.totalorder %s16, 1
    %p81 = por %p79, %p80
    %p83 = scmp.ne.s32.totalorder %s66, %s82
    %p84 = scmp.eq.s32.totalorder %s16, 0
    %p85 = por %p83, %p84
    %s86 = ssub.s32 %s17, %s29
    %s87 = ssub.s32 %s18, %s25
    %s88 = sor.u32 %s86, %s87
    %p89 = scmp.eq.s32.totalorder %s88, 0
    %s91 = sadd.s32 %s90, 1
    %s92 = scalar_select %p89, %s90, %s91
    %p95 = pneg %p89
    %p96 = scmp.eq.s32.totalorder %s10, 1
    %p97 = por %p95, %p96
    %p98 = scmp.ne.s32.totalorder %s90, %s93
    %p99 = scmp.eq.s32.totalorder %s10, 0
    %p100 = por %p98, %p99
    %p101 = scmp.ne.s32.totalorder %s90, %s93
    %p102 = scmp.eq.s32.totalorder %s15, 1
    %p103 = por %p101, %p102
    %p104 = scmp.ne.s32.totalorder %s93, %s94
    %p105 = scmp.eq.s32.totalorder %s15, 0
    %p106 = por %p104, %p105
    %p107 = scmp.ne.s32.totalorder %s93, %s94
    %p108 = scmp.eq.s32.totalorder %s16, 1
    %p109 = por %p107, %p108
    %p111 = scmp.ne.s32.totalorder %s94, %s110
    %p112 = scmp.eq.s32.totalorder %s16, 0
    %p113 = por %p111, %p112
    %s115 = sadd.s32 %s114, 1
    %p118 = scmp.eq.s32.totalorder %s10, 1
    %p119 = scmp.ne.s32.totalorder %s114, %s116
    %p120 = scmp.eq.s32.totalorder %s10, 0
    %p121 = por %p119, %p120
    %p122 = scmp.ne.s32.totalorder %s114, %s116
    %p123 = scmp.eq.s32.totalorder %s15, 1
    %p124 = por %p122, %p123
    %p125 = scmp.ne.s32.totalorder %s116, %s117
    %p126 = scmp.eq.s32.totalorder %s15, 0
    %p127 = por %p125, %p126
    %p128 = scmp.ne.s32.totalorder %s116, %s117
    %p129 = scmp.eq.s32.totalorder %s16, 1
    %p130 = por %p128, %p129
    %p132 = scmp.ne.s32.totalorder %s117, %s131
    %p133 = scmp.eq.s32.totalorder %s16, 0
    %p134 = por %p132, %p133
    %s135 = ssub.s32 %s17, %s29
    %s136 = ssub.s32 %s18, %s25
    %s137 = sor.u32 %s135, %s136
    %p138 = scmp.eq.s32.totalorder %s137, 0
    %s140 = sadd.s32 %s139, 1
    %s141 = scalar_select %p138, %s139, %s140
    %p144 = pneg %p138
    %p145 = scmp.eq.s32.totalorder %s10, 1
    %p146 = por %p144, %p145
    %p147 = scmp.ne.s32.totalorder %s139, %s142
    %p148 = scmp.eq.s32.totalorder %s10, 0
    %p149 = por %p147, %p148
    %p150 = scmp.ne.s32.totalorder %s139, %s142
    %p151 = scmp.eq.s32.totalorder %s15, 1
    %p152 = por %p150, %p151
    %p153 = scmp.ne.s32.totalorder %s142, %s143
    %p154 = scmp.eq.s32.totalorder %s15, 0
    %p155 = por %p153, %p154
    %p156 = scmp.ne.s32.totalorder %s142, %s143
    %p157 = scmp.eq.s32.totalorder %s16, 1
    %p158 = por %p156, %p157
    %p160 = scmp.ne.s32.totalorder %s143, %s159
    %p161 = scmp.eq.s32.totalorder %s16, 0
    %p162 = por %p160, %p161
    %p163 = scmp.le.s32.totalorder 1, %s10
    %p164 = scmp.lt.s32.totalorder %s10, 3
    %p165 = pnand %p163, %p164
    %p166 = pneg %p165
    // Predicated region
    $region9: #{projector_forward.3} parent=5 // pred_check
      _
    $region10: #{projector_forward.3} parent=5 // pred_check_branch
      %168 = sbr.rel (%p165) target = $region12
    $region11: #{projector_forward.3} parent=5 // pred_region
      %s169 = ssub.s32 %s10, 1
      // Predicated region
      $region13: #{projector_forward.3} parent=11 // pred_check
        %p170 = pneg %p127
      $region14: #{projector_forward.3} parent=11 // pred_check_branch
        %172 = sbr.rel (%p170) target = $region16
      $region15: #{projector_forward.3} parent=11 // pred_region
        _
      $region16: #{projector_forward.3} parent=11 // pred_fallthru
        _
    $region12: #{projector_forward.3} parent=5 // pred_fallthru
      _
    %p173 = scmp.lt.s32.totalorder %s10, 2
    // Predicated region
    $region17: #{projector_forward.3} parent=5 // pred_check
      %p174 = pneg %p173
    $region18: #{projector_forward.3} parent=5 // pred_check_branch
      %176 = sbr.rel (%p174) target = $region20
    $region19: #{projector_forward.3} parent=5 // pred_region
      // Predicated region
      $region21: #{projector_forward.3} parent=19 // pred_check
        %p177 = pneg %p44
      $region22: #{projector_forward.3} parent=19 // pred_check_branch
        %179 = sbr.rel (%p177) target = $region24
      $region23: #{projector_forward.3} parent=19 // pred_region
        %s180 = smul.u32 2, %s18
        %p181 = scmp.lt.s32.totalorder %s17, 1
        %s182 = scalar_select %p181, %s17, 1
        %p183 = scmp.lt.s32.totalorder %s180, 1
        %s184 = scalar_select %p183, %s180, 1
        %s185 = smul.addr %s182, 2
        %s186 = sadd.s32 %s184, %s185
        %s187 = smul.addr %s186, 4
        %s188 = scalar_lea.vmem %s0, %s187
        %s189 = smul.u32 2, %s18
      $region24: #{projector_forward.3} parent=19 // pred_fallthru
        _
      // Predicated region
      $region25: #{projector_forward.3} parent=19 // pred_check
        %p190 = pneg %p72
      $region26: #{projector_forward.3} parent=19 // pred_check_branch
        %192 = sbr.rel (%p190) target = $region28
      $region27: #{projector_forward.3} parent=19 // pred_region
        %s193 = smul.u32 2, %s18
        %p194 = scmp.lt.s32.totalorder %s17, 1
        %s195 = scalar_select %p194, %s17, 1
        %p196 = scmp.lt.s32.totalorder %s193, 1
        %s197 = scalar_select %p196, %s193, 1
        %s198 = smul.addr %s195, 2
        %s199 = sadd.s32 %s197, %s198
        %s200 = smul.addr %s199, 2
        %s201 = scalar_lea.vmem %s1, %s200
        %s202 = smul.u32 2, %s18
      $region28: #{projector_forward.3} parent=19 // pred_fallthru
        _
      // Predicated region
      $region29: #{projector_forward.3} parent=19 // pred_check
        %p203 = pneg %p100
      $region30: #{projector_forward.3} parent=19 // pred_check_branch
        %205 = sbr.rel (%p203) target = $region32
      $region31: #{projector_forward.3} parent=19 // pred_region
        %s206 = smul.u32 2, %s18
        %p207 = scmp.lt.s32.totalorder %s17, 1
        %s208 = scalar_select %p207, %s17, 1
        %p209 = scmp.lt.s32.totalorder %s206, 1
        %s210 = scalar_select %p209, %s206, 1
        %s211 = smul.addr %s208, 2
        %s212 = sadd.s32 %s210, %s211
        %s213 = scalar_lea.vmem %s2, %s212
        %s214 = smul.u32 2, %s18
      $region32: #{projector_forward.3} parent=19 // pred_fallthru
        _
    $region20: #{projector_forward.3} parent=5 // pred_fallthru
      _
    %p215 = scmp.le.s32.totalorder 1, %s10
    %p216 = scmp.lt.s32.totalorder %s10, 3
    %p217 = pnand %p215, %p216
    %p218 = pneg %p217
    // Predicated region
    $region33: #{projector_forward.3} parent=5 // pred_check
      _
    $region34: #{projector_forward.3} parent=5 // pred_check_branch
      %220 = sbr.rel (%p217) target = $region36
    $region35: #{projector_forward.3} parent=5 // pred_region
      %s221 = ssub.s32 %s10, 1
      %s222 = smul.u32 2, %s20
      %p223 = scmp.lt.s32.totalorder %s19, 1
      %s224 = scalar_select %p223, %s19, 1
      %p225 = scmp.lt.s32.totalorder %s222, 1
      %s226 = scalar_select %p225, %s222, 1
      %s227 = smul.addr %s224, 2
      %s228 = sadd.s32 %s226, %s227
      %s229 = smul.addr %s228, 4
      %s230 = scalar_lea.vmem %s0, %s229
      %p231 = pneg %p50
      %p232 = pneg %p47
      %s233 = smul.u32 2, %s20
      %p234 = scmp.lt.s32.totalorder %s19, 1
      %s235 = scalar_select %p234, %s19, 1
      %p236 = scmp.lt.s32.totalorder %s233, 1
      %s237 = scalar_select %p236, %s233, 1
      %s238 = smul.addr %s235, 2
      %s239 = sadd.s32 %s237, %s238
      %s240 = smul.addr %s239, 2
      %s241 = scalar_lea.vmem %s1, %s240
      %p242 = pneg %p78
      %p243 = pneg %p75
      %s244 = smul.u32 2, %s20
      %p245 = scmp.lt.s32.totalorder %s19, 1
      %s246 = scalar_select %p245, %s19, 1
      %p247 = scmp.lt.s32.totalorder %s244, 1
      %s248 = scalar_select %p247, %s244, 1
      %s249 = smul.addr %s246, 2
      %s250 = sadd.s32 %s248, %s249
      %s251 = scalar_lea.vmem %s2, %s250
      %p252 = pneg %p106
      %p253 = pneg %p103
      %p254 = pneg %p127
      %p255 = pneg %p124
      %p256 = pneg %p155
      %p257 = pneg %p152
      %s258 = smul.u32 2, %s20
      %p259 = scmp.lt.s32.totalorder %s19, 1
      %s260 = scalar_select %p259, %s19, 1
      %p261 = scmp.lt.s32.totalorder %s258, 1
      %s262 = scalar_select %p261, %s258, 1
      %s263 = smul.addr %s260, 2
      %s264 = sadd.s32 %s262, %s263
      %s265 = smul.addr %s264, 4
      %s266 = scalar_lea.vmem %s4, %s265
      %s267 = smul.u32 2, %s20
      %p268 = scmp.lt.s32.totalorder %s19, 1
      %s269 = scalar_select %p268, %s19, 1
      %p270 = scmp.lt.s32.totalorder %s267, 1
      %s271 = scalar_select %p270, %s267, 1
      %s272 = smul.addr %s269, 2
      %s273 = sadd.s32 %s271, %s272
      %s274 = smul.addr %s273, 4
      %s275 = scalar_lea.vmem %s0, %s274
      %s276 = smul.u32 2, %s20
      %s277 = smul.u32 2, %s20
      %p278 = scmp.lt.s32.totalorder %s19, 1
      %s279 = scalar_select %p278, %s19, 1
      %p280 = scmp.lt.s32.totalorder %s277, 1
      %s281 = scalar_select %p280, %s277, 1
      %s282 = smul.addr %s279, 2
      %s283 = sadd.s32 %s281, %s282
      %s284 = smul.addr %s283, 2
      %s285 = scalar_lea.vmem %s1, %s284
      %s286 = smul.u32 2, %s20
      %s287 = smul.u32 2, %s20
      %p288 = scmp.lt.s32.totalorder %s19, 1
      %s289 = scalar_select %p288, %s19, 1
      %p290 = scmp.lt.s32.totalorder %s287, 1
      %s291 = scalar_select %p290, %s287, 1
      %s292 = smul.addr %s289, 2
      %s293 = sadd.s32 %s291, %s292
      %s294 = scalar_lea.vmem %s2, %s293
      %s295 = smul.u32 2, %s20
      %s296 = smul.u32 2, %s20
      %p297 = scmp.lt.s32.totalorder %s19, 1
      %s298 = scalar_select %p297, %s19, 1
      %p299 = scmp.lt.s32.totalorder %s296, 1
      %s300 = scalar_select %p299, %s296, 1
      %s301 = smul.addr %s298, 2
      %s302 = sadd.s32 %s300, %s301
      %s303 = smul.addr %s302, 4
      %s304 = scalar_lea.vmem %s4, %s303
      %s305 = smul.u32 2, %s20
      %v306 = vld [vmem:[%s294] sm:$0x3]
      %v307 = vld [vmem:[%s275] sm:$0xff]
      %v309 = vperm.slane %v306, 0
      %v310 = vperm.slane %v306, 1
      %v311 = vrot.slane %v310, 4
      %vm312 = vcmask 1043456
      %v313 = vsel %vm312, %v309, %v311
      %v315 = vmul.f32 %v307, %v313
      %v316 = vld [vmem:[%s3] sm:$0xf]
      %v317 = vsub.f32 1.0, %v306
      %319 = vset.pattern.permute.xlu0 0
      %320 = vperm.xlu0 %319, %v316
      %v321 = vpop.permute.xlu0 %320
      %v324 = vperm.slane %v317, 0
      %v325 = vperm.slane %v317, 1
      %v328 = vmul.f32 %v321, %v324
      %v329 = vmul.f32 %v321, %v325
      %v332 = vrot.slane %v329, 4
      %v333 = vsel %vm312, %v328, %v332
      %v335 = vadd.f32 %v315, %v333
      %v336 = vld [vmem:[%s285] sm:$0xf]
      %v337 = vunpack.c.l.bf16 %v336
      %v338 = vadd.f32 %v335, %v337
      %339 = vst [vmem:[%s304] sm:$0xff] %v338
      %s340 = smul.u32 2, %s20
      %p341 = scmp.lt.s32.totalorder %s19, 1
      %s342 = scalar_select %p341, %s19, 1
      %p343 = scmp.lt.s32.totalorder %s340, 1
      %s344 = scalar_select %p343, %s340, 1
      %s345 = smul.addr %s342, 2
      %s346 = sadd.s32 %s344, %s345
      %s347 = smul.addr %s346, 4
      %s348 = scalar_lea.vmem %s4, %s347
      // Predicated region
      $region37: #{projector_forward.3} parent=35 // pred_check
        %p349 = pneg %p152
      $region38: #{projector_forward.3} parent=35 // pred_check_branch
        %351 = sbr.rel (%p349) target = $region40
      $region39: #{projector_forward.3} parent=35 // pred_region
        %s352 = smul.u32 2, %s20
      $region40: #{projector_forward.3} parent=35 // pred_fallthru
        _
    $region36: #{projector_forward.3} parent=5 // pred_fallthru
      _
    %p353 = scmp.le.s32.totalorder 2, %s10
    // Predicated region
    $region41: #{projector_forward.3} parent=5 // pred_check
      %p354 = pneg %p353
    $region42: #{projector_forward.3} parent=5 // pred_check_branch
      %356 = sbr.rel (%p354) target = $region44
    $region43: #{projector_forward.3} parent=5 // pred_region
      %s357 = ssub.s32 %s10, 2
      // Predicated region
      $region45: #{projector_forward.3} parent=43 // pred_check
        %p358 = pneg %p158
      $region46: #{projector_forward.3} parent=43 // pred_check_branch
        %360 = sbr.rel (%p358) target = $region48
      $region47: #{projector_forward.3} parent=43 // pred_region
        %s361 = smul.u32 2, %s22
        %p362 = scmp.lt.s32.totalorder %s21, 1
        %s363 = scalar_select %p362, %s21, 1
        %p364 = scmp.lt.s32.totalorder %s361, 1
        %s365 = scalar_select %p364, %s361, 1
        %s366 = smul.addr %s363, 2
        %s367 = sadd.s32 %s365, %s366
        %s368 = smul.addr %s367, 4
        %s369 = scalar_lea.vmem %s4, %s368
      $region48: #{projector_forward.3} parent=43 // pred_fallthru
        _
    $region44: #{projector_forward.3} parent=5 // pred_fallthru
      _
  $region6: #{projector_forward.3} parent=0 // loop_footer
    %s14 = sadd.s32 1, %s10
  $region7: #{projector_forward.3} parent=0 // loop_footer_branch
    %9 = sbr.rel target = $region3
  $region8: #{projector_forward.3} parent=0 // loop_exit
    _

</llo_original>
